<compile_context>
chip_gen: v7x
topology: tpu7x:2x2x1
jax: 0.10.0
libtpu: 0.0.40
codegen_flags: <defaults>
</compile_context>

<pallas_src>
import jax
import jax.numpy as jnp
from jax.experimental import pallas as pl
from jax.experimental.pallas import tpu as pltpu


def _round_up(n, m):
    return ((n + m - 1) // m) * m


def _cdiv(a, b):
    return -(-a // b)


def _choose_batch_tile(B, block_b):
    """Pick the batch tile size.

    - Large batches: tiles of block_b rows (multiple of 8).
    - Moderate batches (16 <= B <= block_b): split into >= 2 tiles so the
      "parallel" grid axis has work for both v7x TensorCores.
    - Tiny batches (B < 16): a single full-batch tile.
    """
    if B > block_b:
        return block_b
    if B >= 16:
        return _round_up(_cdiv(B, 2), 8)
    return B


# -----------------------------------------------------------------------------
# Fused kernel: 3 matmuls + bias + relu/relu/tanh + scale, one batch tile.
# All hidden widths are lane-padded (multiples of 128) so every bias add /
# ReLU / dtype pack runs on full vregs.  Only the final (batch, A) result uses
# a narrow lane width, and it is tiny.
# -----------------------------------------------------------------------------
def _actor_kernel(scale_ref,                       # SMEM (1,1) f32
                  x_ref, w1_ref, w2_ref, w3_ref,   # VMEM
                  b_ref,                           # VMEM (3, pad) f32 packed biases
                  o_ref):
    h1w = w1_ref.shape[1]        # padded hidden-1 width (e.g. 512)
    h2w = w2_ref.shape[1]        # padded hidden-2 width (e.g. 384)
    aw = w3_ref.shape[1]         # action dim (unpadded, e.g. 8)

    x = x_ref[...].astype(jnp.bfloat16)

    # Layer 1: Linear + ReLU  (bf16 operands, f32 accumulation)
    h1 = jnp.dot(x, w1_ref[...], preferred_element_type=jnp.float32)
    h1 = jnp.maximum(h1 + b_ref[0:1, :h1w], 0.0)

    # Layer 2: Linear + ReLU
    h2 = jnp.dot(h1.astype(jnp.bfloat16), w2_ref[...],
                 preferred_element_type=jnp.float32)
    h2 = jnp.maximum(h2 + b_ref[1:2, :h2w], 0.0)

    # Layer 3: Linear + Tanh, then scale by max_action (SMEM scalar)
    a = jnp.dot(h2.astype(jnp.bfloat16), w3_ref[...],
                preferred_element_type=jnp.float32)
    a = jnp.tanh(a + b_ref[2:3, :aw])

    o_ref[...] = (scale_ref[0, 0] * a).astype(o_ref.dtype)


# -----------------------------------------------------------------------------
# Wrapper: batch-tiled 1-D grid, weights resident via constant index_map.
# -----------------------------------------------------------------------------
def actor_forward(x, params, max_action, *, block_b=1024):
    w1, w2, w3, b_packed = params
    B, S = x.shape
    A = w3.shape[1]

    bt = _choose_batch_tile(B, block_b)
    Bp = _round_up(B, bt)
    x_in = jnp.pad(x, ((0, Bp - B), (0, 0))) if Bp != B else x

    grid = (Bp // bt,)
    scale = jnp.asarray(max_action, dtype=jnp.float32).reshape(1, 1)

    out = pl.pallas_call(
        _actor_kernel,
        out_shape=jax.ShapeDtypeStruct((Bp, A), jnp.float32),
        grid=grid,
        in_specs=[
            pl.BlockSpec(memory_space=pltpu.MemorySpace.SMEM),       # max_action
            pl.BlockSpec((bt, S), lambda i: (i, 0)),                 # x tile
            pl.BlockSpec(w1.shape, lambda i: (0, 0)),                # weights stay
            pl.BlockSpec(w2.shape, lambda i: (0, 0)),                # resident across
            pl.BlockSpec(w3.shape, lambda i: (0, 0)),                # grid steps
            pl.BlockSpec(b_packed.shape, lambda i: (0, 0)),          # packed biases
        ],
        out_specs=pl.BlockSpec((bt, A), lambda i: (i, 0)),
        compiler_params=pltpu.CompilerParams(
            dimension_semantics=("parallel",),
            vmem_limit_bytes=48 * 1024 * 1024,
        ),
    )(scale, x_in, w1, w2, w3, b_packed)

    return out[:B] if Bp != B else out


# -----------------------------------------------------------------------------
# Deterministic init (mimics PyTorch nn.Linear uniform(-1/sqrt(in), 1/sqrt(in))).
# Weights are zero-padded to lane-aligned hidden widths and stored bf16 with
# shape (in_dim, out_dim); biases packed into one f32 buffer (3, pad).
# Zero padding is numerically exact for this relu/relu/tanh stack.
# -----------------------------------------------------------------------------
def init_actor_params(key, state_dim, action_dim, hidden_dims=(400, 300)):
    dims = (state_dim,) + tuple(hidden_dims) + (action_dim,)
    h1p = _round_up(hidden_dims[0], 128)
    h2p = _round_up(hidden_dims[1], 128)
    padded_in = (state_dim, h1p, h2p)
    padded_out = (h1p, h2p, action_dim)      # output (A) left unpadded

    ws, bs = [], []
    for (in_dim, out_dim), pin, pout in zip(zip(dims, dims[1:]),
                                            padded_in, padded_out):
        key, kw, kb = jax.random.split(key, 3)
        bound = 1.0 / (in_dim ** 0.5)
        w = jax.random.uniform(kw, (in_dim, out_dim), jnp.float32, -bound, bound)
        b = jax.random.uniform(kb, (out_dim,), jnp.float32, -bound, bound)
        wp = jnp.zeros((pin, pout), jnp.float32).at[:in_dim, :out_dim].set(w)
        ws.append(wp.astype(jnp.bfloat16))
        bs.append(b)

    pad_w = max(h1p, h2p, _round_up(action_dim, 128))
    b_packed = jnp.zeros((len(bs), pad_w), jnp.float32)
    for i, b in enumerate(bs):
        b_packed = b_packed.at[i, :b.shape[0]].set(b)

    return (ws[0], ws[1], ws[2], b_packed)


# Pure-JAX reference (same padded params, same bf16 operands / f32 accumulation).
def actor_reference(x, params, max_action):
    w1, w2, w3, b_packed = params
    b1 = b_packed[0, :w1.shape[1]]
    b2 = b_packed[1, :w2.shape[1]]
    b3 = b_packed[2, :w3.shape[1]]
    h1 = jnp.maximum(
        jnp.dot(x.astype(jnp.bfloat16), w1, preferred_element_type=jnp.float32) + b1, 0.0)
    h2 = jnp.maximum(
        jnp.dot(h1.astype(jnp.bfloat16), w2, preferred_element_type=jnp.float32) + b2, 0.0)
    a = jnp.tanh(
        jnp.dot(h2.astype(jnp.bfloat16), w3, preferred_element_type=jnp.float32) + b3)
    return jnp.float32(max_action) * a


if __name__ == "__main__":
    state_dim = 16
    action_dim = 8
    hidden_dims = (400, 300)
    max_action = 2.0

    key = jax.random.PRNGKey(0)
    key, kx1, kx2 = jax.random.split(key, 3)
    params = init_actor_params(key, state_dim, action_dim, hidden_dims)

    # Case 1: tiny rollout batch (single tile, B < 16).
    x_small = jax.random.normal(kx1, (8, state_dim), jnp.float32)
    out_small = jax.block_until_ready(actor_forward(x_small, params, max_action))
    ref_small = actor_reference(x_small, params, max_action)
    assert out_small.shape == (8, action_dim)
    assert jnp.allclose(out_small, ref_small, atol=1e-3, rtol=1e-3), "small-batch mismatch"

    # Case 2: moderate batch (split into >=2 tiles, exercises batch padding).
    x_mid = jax.random.normal(kx2, (20, state_dim), jnp.float32)
    out_mid = jax.block_until_ready(actor_forward(x_mid, params, max_action))
    ref_mid = actor_reference(x_mid, params, max_action)
    assert out_mid.shape == (20, action_dim)
    assert jnp.allclose(out_mid, ref_mid, atol=1e-3, rtol=1e-3), "mid-batch mismatch"

    print("KERNEL_OK")
</pallas_src>

<mosaic_0001>
module attributes {stable_mosaic.version = 11 : i64} {
  func.func @_actor_kernel(%arg0: i32, %arg1: memref<1x1xf32, #tpu.memory_space<smem>>, %arg2: memref<8x16xf32, #tpu.memory_space<vmem>>, %arg3: memref<16x512xbf16, #tpu.memory_space<vmem>>, %arg4: memref<512x384xbf16, #tpu.memory_space<vmem>>, %arg5: memref<384x8xbf16, #tpu.memory_space<vmem>>, %arg6: memref<3x512xf32, #tpu.memory_space<vmem>>, %arg7: memref<8x8xf32, #tpu.memory_space<vmem>>) attributes {dimension_semantics = [#tpu.dimension_semantics<parallel>], iteration_bounds = array<i64: 1>, scalar_prefetch = 0 : i64, scratch_operands = 0 : i64, tpu.core_type = #tpu.core_type<tc>, window_params = [{transform_indices = @transform_0, window_bounds = array<i64: 1, 1>}, {transform_indices = @transform_1, window_bounds = array<i64: 8, 16>}, {pipeline_mode = #tpu.pipeline_mode<synchronous>, transform_indices = @transform_2, window_bounds = array<i64: 16, 512>}, {pipeline_mode = #tpu.pipeline_mode<synchronous>, transform_indices = @transform_3, window_bounds = array<i64: 512, 384>}, {pipeline_mode = #tpu.pipeline_mode<synchronous>, transform_indices = @transform_4, window_bounds = array<i64: 384, 8>}, {pipeline_mode = #tpu.pipeline_mode<synchronous>, transform_indices = @transform_5, window_bounds = array<i64: 3, 512>}, {transform_indices = @transform_6, window_bounds = array<i64: 8, 8>}]} {
    %c0 = arith.constant 0 : index
    %c0_0 = arith.constant 0 : index
    %0 = vector.load %arg2[%c0, %c0_0] : memref<8x16xf32, #tpu.memory_space<vmem>>, vector<8x16xf32>
    %1 = arith.truncf %0 : vector<8x16xf32> to vector<8x16xbf16>
    %c0_1 = arith.constant 0 : index
    %c0_2 = arith.constant 0 : index
    %2 = vector.load %arg3[%c0_1, %c0_2] : memref<16x512xbf16, #tpu.memory_space<vmem>>, vector<16x512xbf16>
    %cst = arith.constant dense<0.000000e+00> : vector<8x512xf32>
    %3 = tpu.matmul %1, %2, %cst {dimension_numbers = #tpu.dot_dimension_numbers<[1], [0], [0], [1], [0, 0, 1, 1], [], []>} : vector<8x16xbf16>, vector<16x512xbf16>, vector<8x512xf32> -> vector<8x512xf32>
    %c0_3 = arith.constant 0 : index
    %c0_4 = arith.constant 0 : index
    %4 = vector.load %arg6[%c0_3, %c0_4] : memref<3x512xf32, #tpu.memory_space<vmem>>, vector<1x512xf32>
    %5 = vector.broadcast %4 : vector<1x512xf32> to vector<8x512xf32>
    %6 = arith.addf %3, %5 : vector<8x512xf32>
    %cst_5 = arith.constant 0.000000e+00 : f32
    %7 = vector.broadcast %cst_5 : f32 to vector<8x512xf32>
    %8 = arith.maximumf %6, %7 : vector<8x512xf32>
    %9 = arith.truncf %8 : vector<8x512xf32> to vector<8x512xbf16>
    %c0_6 = arith.constant 0 : index
    %c0_7 = arith.constant 0 : index
    %10 = vector.load %arg4[%c0_6, %c0_7] : memref<512x384xbf16, #tpu.memory_space<vmem>>, vector<512x384xbf16>
    %cst_8 = arith.constant dense<0.000000e+00> : vector<8x384xf32>
    %11 = tpu.matmul %9, %10, %cst_8 {dimension_numbers = #tpu.dot_dimension_numbers<[1], [0], [0], [1], [0, 0, 1, 1], [], []>} : vector<8x512xbf16>, vector<512x384xbf16>, vector<8x384xf32> -> vector<8x384xf32>
    %c1 = arith.constant 1 : index
    %c0_9 = arith.constant 0 : index
    %12 = vector.load %arg6[%c1, %c0_9] : memref<3x512xf32, #tpu.memory_space<vmem>>, vector<1x384xf32>
    %13 = vector.broadcast %12 : vector<1x384xf32> to vector<8x384xf32>
    %14 = arith.addf %11, %13 : vector<8x384xf32>
    %cst_10 = arith.constant 0.000000e+00 : f32
    %15 = vector.broadcast %cst_10 : f32 to vector<8x384xf32>
    %16 = arith.maximumf %14, %15 : vector<8x384xf32>
    %17 = arith.truncf %16 : vector<8x384xf32> to vector<8x384xbf16>
    %c0_11 = arith.constant 0 : index
    %c0_12 = arith.constant 0 : index
    %18 = vector.load %arg5[%c0_11, %c0_12] : memref<384x8xbf16, #tpu.memory_space<vmem>>, vector<384x8xbf16>
    %cst_13 = arith.constant dense<0.000000e+00> : vector<8x8xf32>
    %19 = tpu.matmul %17, %18, %cst_13 {dimension_numbers = #tpu.dot_dimension_numbers<[1], [0], [0], [1], [0, 0, 1, 1], [], []>} : vector<8x384xbf16>, vector<384x8xbf16>, vector<8x8xf32> -> vector<8x8xf32>
    %c2 = arith.constant 2 : index
    %c0_14 = arith.constant 0 : index
    %20 = vector.load %arg6[%c2, %c0_14] : memref<3x512xf32, #tpu.memory_space<vmem>>, vector<1x8xf32>
    %21 = vector.broadcast %20 : vector<1x8xf32> to vector<8x8xf32>
    %22 = arith.addf %19, %21 : vector<8x8xf32>
    %23 = math.tanh %22 : vector<8x8xf32>
    %c0_15 = arith.constant 0 : index
    %c0_16 = arith.constant 0 : index
    %24 = memref.load %arg1[%c0_15, %c0_16] : memref<1x1xf32, #tpu.memory_space<smem>>
    %25 = vector.broadcast %24 : f32 to vector<8x8xf32>
    %26 = arith.mulf %25, %23 : vector<8x8xf32>
    %c0_17 = arith.constant 0 : index
    %c0_18 = arith.constant 0 : index
    %27 = vector.load %arg7[%c0_17, %c0_18] : memref<8x8xf32, #tpu.memory_space<vmem>>, vector<8x8xf32>
    tpu.vector_store %arg7[%c0_17, %c0_18], %26 {strides = array<i32>} : memref<8x8xf32, #tpu.memory_space<vmem>>, vector<8x8xf32>,
    return
  }
  func.func @transform_0(%arg0: i32) -> (i32, i32) {
    %c0_i32 = arith.constant 0 : i32
    %c0_i32_0 = arith.constant 0 : i32
    %c0_i32_1 = arith.constant 0 : i32
    return %c0_i32, %c0_i32_0 : i32, i32
  }
  func.func @transform_1(%arg0: i32) -> (i32, i32) {
    %c0_i32 = arith.constant 0 : i32
    %c0_i32_0 = arith.constant 0 : i32
    return %arg0, %c0_i32 : i32, i32
  }
  func.func @transform_2(%arg0: i32) -> (i32, i32) {
    %c0_i32 = arith.constant 0 : i32
    %c0_i32_0 = arith.constant 0 : i32
    %c0_i32_1 = arith.constant 0 : i32
    return %c0_i32, %c0_i32_0 : i32, i32
  }
  func.func @transform_3(%arg0: i32) -> (i32, i32) {
    %c0_i32 = arith.constant 0 : i32
    %c0_i32_0 = arith.constant 0 : i32
    %c0_i32_1 = arith.constant 0 : i32
    return %c0_i32, %c0_i32_0 : i32, i32
  }
  func.func @transform_4(%arg0: i32) -> (i32, i32) {
    %c0_i32 = arith.constant 0 : i32
    %c0_i32_0 = arith.constant 0 : i32
    %c0_i32_1 = arith.constant 0 : i32
    return %c0_i32, %c0_i32_0 : i32, i32
  }
  func.func @transform_5(%arg0: i32) -> (i32, i32) {
    %c0_i32 = arith.constant 0 : i32
    %c0_i32_0 = arith.constant 0 : i32
    %c0_i32_1 = arith.constant 0 : i32
    return %c0_i32, %c0_i32_0 : i32, i32
  }
  func.func @transform_6(%arg0: i32) -> (i32, i32) {
    %c0_i32 = arith.constant 0 : i32
    %c0_i32_0 = arith.constant 0 : i32
    return %arg0, %c0_i32 : i32, i32
  }
}

</mosaic_0001>

<llo_original>
// kernel: tpu_custom_call.1
$region0: #{tpu_custom_call.1}
  #allocation0 [shape = 'u32[]', space=smem, size = 0x4, offset = 0x4, fixed_abs, tag = 'smem constant byte address 0x4 - core index']
  #allocation1 [shape = 'u32[144,128]{1,0:T(1,128)}', space=vmem, size = 0x12000, scoped, tag = 'internal scratch']
  #allocation2 [shape = 'f32[1,1]{1,0:T(1,128)S(6)}', space=smem, size = 0x200, scoped, tag = 'scoped memory for tpu_custom_call.1']
  %s0 = inlined_call_operand.<no memory space> [shape: f32[1,1], index: 0, kind: input, shape index: {}]
  %s1 = inlined_call_operand.vmem [shape: f32[8,16], index: 1, kind: input, shape index: {}]
  %s2 = inlined_call_operand.vmem [shape: bf16[16,512], index: 2, kind: input, shape index: {}]
  %s3 = inlined_call_operand.hbm [shape: bf16[512,384], index: 3, kind: input, shape index: {}]
  %s4 = inlined_call_operand.vmem [shape: bf16[384,8], index: 4, kind: input, shape index: {}]
  %s5 = inlined_call_operand.vmem [shape: f32[3,512], index: 5, kind: input, shape index: {}]
  %s6 = inlined_call_operand.hbm [shape: f32[8,8], index: 6, kind: output, shape index: {}]
  %s7 = sld [smem:[#allocation0]]
  $region38: #{tpu_custom_call.1} parent=0
    _
  %s9 = ssub.s32 1, %s7
  %s10 = scalar_select 0, %s9, %s7
  %11 = sst [smem:[#allocation2]] %s0
  $region1: #{tpu_custom_call.1} parent=0
    #allocation3 [shape = 'u8[393216]{0}', space=vmem, size = 0x60000, scoped, tag = 'input window, operand 3, single buffered']
    #allocation4 [shape = 's32[1]{0}', space=sflag, size = 0x4, scoped, tag = 'scoped memory for tpu_custom_call.1']
    #allocation5 [shape = 's32[1]{0}', space=sflag, size = 0x4, scoped, tag = 'scoped memory for tpu_custom_call.1']
    #allocation6 [shape = 'u8[4096]{0}', space=vmem, size = 0x1000, scoped, tag = 'output window, operand 0, single buffered']
    %12 = vsyncpa [#allocation4], 0
    %13 = vsyncpa [#allocation5], 0
    // Predicated region
    $region2: #{tpu_custom_call.1} parent=1 // pred_check
      _
    $region3: #{tpu_custom_call.1} parent=1 // pred_check_branch
      %15 = sbr.rel (0) target = $region5
    $region4: #{tpu_custom_call.1} parent=1 // pred_region
      _
    $region5: #{tpu_custom_call.1} parent=1 // pred_fallthru
      _
    // Predicated region
    $region6: #{tpu_custom_call.1} parent=1 // pred_check
      _
    $region7: #{tpu_custom_call.1} parent=1 // pred_check_branch
      %17 = sbr.rel (0) target = $region9
    $region8: #{tpu_custom_call.1} parent=1 // pred_region
      _
    $region9: #{tpu_custom_call.1} parent=1 // pred_fallthru
      _
    // Predicated region
    $region10: #{tpu_custom_call.1} parent=1 // pred_check
      _
    $region11: #{tpu_custom_call.1} parent=1 // pred_check_branch
      %19 = sbr.rel (0) target = $region13
    $region12: #{tpu_custom_call.1} parent=1 // pred_region
      _
    $region13: #{tpu_custom_call.1} parent=1 // pred_fallthru
      _
    // Predicated region
    $region14: #{tpu_custom_call.1} parent=1 // pred_check
      _
    $region15: #{tpu_custom_call.1} parent=1 // pred_check_branch
      %21 = sbr.rel (0) target = $region17
    $region16: #{tpu_custom_call.1} parent=1 // pred_region
      %s23 = ssub.s32 12288, 12288
      %24 = vsyncadd [#allocation4], %s23
      %s25 = sshll.u32 [#allocation3], 4
      %s26 = int_to_ptr.vmem [resolvable:$true] %s25
      %31 = dma.hbm_to_vmem [thread:$0]  %s3, 12288, %s26, [#allocation4], 192, 192, 12
    $region17: #{tpu_custom_call.1} parent=1 // pred_fallthru
      _
    // Predicated region
    $region18: #{tpu_custom_call.1} parent=1 // pred_check
      _
    $region19: #{tpu_custom_call.1} parent=1 // pred_check_branch
      %33 = sbr.rel (0) target = $region21
    $region20: #{tpu_custom_call.1} parent=1 // pred_region
      _
    $region21: #{tpu_custom_call.1} parent=1 // pred_fallthru
      _
    // Predicated region
    $region22: #{tpu_custom_call.1} parent=1 // pred_check
      _
    $region23: #{tpu_custom_call.1} parent=1 // pred_check_branch
      %35 = sbr.rel (0) target = $region25
    $region24: #{tpu_custom_call.1} parent=1 // pred_region
      _
    $region25: #{tpu_custom_call.1} parent=1 // pred_fallthru
      _
    // Predicated region
    $region26: #{tpu_custom_call.1} parent=1 // pred_check
      _
    $region27: #{tpu_custom_call.1} parent=1 // pred_check_branch
      %37 = sbr.rel (0) target = $region29
    $region28: #{tpu_custom_call.1} parent=1 // pred_region
      %38 = dma.done [#allocation4], 12288
    $region29: #{tpu_custom_call.1} parent=1 // pred_fallthru
      _
    %v40 = vld [vmem:[%s1] sm:$0xff]
    %v41 = vpack.c.bf16 %v40, %v40
    %v42 = vld [vmem:[%s2] sm:$0xff]
    %v43 = vld [vmem:[%s2 + $0x8] sm:$0xff]
    %v44 = vld [vmem:[%s2 + $0x10] sm:$0xff]
    %v45 = vld [vmem:[%s2 + $0x18] sm:$0xff]
    %v46 = vld [vmem:[%s5] ss:$4 sm:$0xf]
    %v48 = vlaneseq
    %v49 = vshrl.u32 %v48, 7
    %v50 = vsub.s32 0, %v49
    %v51 = vrot.slane %v46, %v50
    %v52 = vlaneseq
    %v53 = vshrl.u32 %v52, 7
    %v54 = vsub.s32 1, %v53
    %v55 = vrot.slane %v46, %v54
    %v56 = vlaneseq
    %v57 = vshrl.u32 %v56, 7
    %v58 = vsub.s32 2, %v57
    %v59 = vrot.slane %v46, %v58
    %v60 = vlaneseq
    %v61 = vshrl.u32 %v60, 7
    %v62 = vsub.s32 3, %v61
    %v63 = vrot.slane %v46, %v62
    %v72 = vunpack.c.l.b16 %v42
    %v73 = vunpack.c.h.b16 %v42
    %v74 = vunpack.c.l.b16 %v43
    %v75 = vunpack.c.h.b16 %v43
    %v76 = vunpack.c.l.b16 %v44
    %v77 = vunpack.c.h.b16 %v44
    %v78 = vunpack.c.l.b16 %v45
    %v79 = vunpack.c.h.b16 %v45
    %v80 = vpack.c.b16 %v76, %v72
    %v81 = vpack.c.b16 %v77, %v73
    %v82 = vpack.c.b16 %v78, %v74
    %v83 = vpack.c.b16 %v79, %v75
    %vm88 = vcmask 130048
    %v90 = vsel %vm88, %v41, 0
    %92 = vmatprep.subr.bf16.mxu0 %v81
    %93 = vmatpush1.bf16.msra.mxu0 %v80
    %94 = vmatprep.subr.bf16.mxu0 0
    %95 = vmatpush1.bf16.msra.mxu0 0
    %96 = vmatprep.subr.bf16.mxu0 0
    %97 = vmatpush1.bf16.msra.mxu0 0
    %98 = vmatprep.subr.bf16.mxu0 0
    %99 = vmatpush1.bf16.msra.mxu0 0
    %100 = vmatprep.subr.bf16.mxu0 0
    %101 = vmatpush1.bf16.msra.mxu0 0
    %102 = vmatprep.subr.bf16.mxu0 0
    %103 = vmatpush1.bf16.msra.mxu0 0
    %104 = vmatprep.subr.bf16.mxu0 0
    %105 = vmatpush1.bf16.msra.mxu0 0
    %106 = vmatprep.subr.bf16.mxu0 0
    %107 = vmatpush1.bf16.msra.mxu0 0
    %108 = vmatprep.subr.bf16.mxu0 0
    %109 = vmatpush1.bf16.msra.mxu0 0
    %110 = vmatprep.subr.bf16.mxu0 0
    %111 = vmatpush1.bf16.msra.mxu0 0
    %112 = vmatprep.subr.bf16.mxu0 0
    %113 = vmatpush1.bf16.msra.mxu0 0
    %114 = vmatprep.subr.bf16.mxu0 0
    %115 = vmatpush1.bf16.msra.mxu0 0
    %116 = vmatprep.subr.bf16.mxu0 0
    %117 = vmatpush1.bf16.msra.mxu0 0
    %118 = vmatprep.subr.bf16.mxu0 0
    %119 = vmatpush1.bf16.msra.mxu0 0
    %120 = vmatprep.subr.bf16.mxu0 0
    %121 = vmatpush1.bf16.msra.mxu0 0
    %122 = vmatprep.subr.bf16.mxu0 0
    %123 = vmatpush1.bf16.msra.mxu0 0
    %124 = vmatprep.mubr.bf16.mxu0 0
    %125 = vmatmul.mubr.bf16.gmra.mrb[0].mxu0 %v90
    %v126 = vpop.f32.mrb[0].mxu0
    %v127 = vadd.f32 %v51, %v126
    %v128 = vpop.f32.mrb[0].mxu0
    %v129 = vadd.f32 %v55, %v128
    %v130 = vpop.f32.mrb[0].mxu0
    %v131 = vpop.f32.mrb[0].mxu0
    %132 = vdwg.mxu0
    %133 = vmatprep.subr.bf16.mxu0 %v83
    %134 = vmatpush1.bf16.msra.mxu0 %v82
    %135 = vmatprep.subr.bf16.mxu0 0
    %136 = vmatpush1.bf16.msra.mxu0 0
    %137 = vmatprep.subr.bf16.mxu0 0
    %138 = vmatpush1.bf16.msra.mxu0 0
    %139 = vmatprep.subr.bf16.mxu0 0
    %140 = vmatpush1.bf16.msra.mxu0 0
    %141 = vmatprep.subr.bf16.mxu0 0
    %142 = vmatpush1.bf16.msra.mxu0 0
    %143 = vmatprep.subr.bf16.mxu0 0
    %144 = vmatpush1.bf16.msra.mxu0 0
    %145 = vmatprep.subr.bf16.mxu0 0
    %146 = vmatpush1.bf16.msra.mxu0 0
    %147 = vmatprep.subr.bf16.mxu0 0
    %148 = vmatpush1.bf16.msra.mxu0 0
    %149 = vmatprep.subr.bf16.mxu0 0
    %150 = vmatpush1.bf16.msra.mxu0 0
    %151 = vmatprep.subr.bf16.mxu0 0
    %152 = vmatpush1.bf16.msra.mxu0 0
    %153 = vmatprep.subr.bf16.mxu0 0
    %154 = vmatpush1.bf16.msra.mxu0 0
    %155 = vmatprep.subr.bf16.mxu0 0
    %156 = vmatpush1.bf16.msra.mxu0 0
    %157 = vmatprep.subr.bf16.mxu0 0
    %158 = vmatpush1.bf16.msra.mxu0 0
    %159 = vmatprep.subr.bf16.mxu0 0
    %160 = vmatpush1.bf16.msra.mxu0 0
    %161 = vmatprep.subr.bf16.mxu0 0
    %162 = vmatpush1.bf16.msra.mxu0 0
    %163 = vmatprep.subr.bf16.mxu0 0
    %164 = vmatpush1.bf16.msra.mxu0 0
    %165 = vmatprep.mubr.bf16.mxu0 0
    %166 = vmatmul.mubr.bf16.gmra.mrb[0].mxu0 %v90
    %v167 = vpop.f32.mrb[0].mxu0
    %v168 = vadd.f32 %v59, %v167
    %v169 = vpop.f32.mrb[0].mxu0
    %v170 = vadd.f32 %v63, %v169
    %v171 = vpop.f32.mrb[0].mxu0
    %v172 = vpop.f32.mrb[0].mxu0
    %173 = vdwg.mxu0
    %v174 = vmax.f32 %v127, 0.0
    %v175 = vmax.f32 %v129, 0.0
    %v176 = vmax.f32 %v168, 0.0
    %v177 = vmax.f32 %v170, 0.0
    %v178 = vpack.c.bf16 %v174, %v174
    %v179 = vpack.c.bf16 %v175, %v175
    %v180 = vpack.c.bf16 %v176, %v176
    %v181 = vpack.c.bf16 %v177, %v177
    %v182 = vld [vmem:[#allocation3] sm:$0xff]
    %v183 = vld [vmem:[#allocation3 + $0x8] sm:$0xf]
    %v184 = vld [vmem:[#allocation3 + $0xc] sm:$0xff]
    %v185 = vld [vmem:[#allocation3 + $0x14] sm:$0xf]
    %v186 = vld [vmem:[#allocation3 + $0x18] sm:$0xff]
    %v187 = vld [vmem:[#allocation3 + $0x20] sm:$0xf]
    %v188 = vld [vmem:[#allocation3 + $0x24] sm:$0xff]
    %v189 = vld [vmem:[#allocation3 + $0x2c] sm:$0xf]
    %v190 = vld [vmem:[#allocation3 + $0x30] sm:$0xff]
    %v191 = vld [vmem:[#allocation3 + $0x38] sm:$0xf]
    %v192 = vld [vmem:[#allocation3 + $0x3c] sm:$0xff]
    %v193 = vld [vmem:[#allocation3 + $0x44] sm:$0xf]
    %v194 = vld [vmem:[#allocation3 + $0x48] sm:$0xff]
    %v195 = vld [vmem:[#allocation3 + $0x50] sm:$0xf]
    %v196 = vld [vmem:[#allocation3 + $0x54] sm:$0xff]
    %v197 = vld [vmem:[#allocation3 + $0x5c] sm:$0xf]
    %v198 = vld [vmem:[#allocation3 + $0x60] sm:$0xff]
    %v199 = vld [vmem:[#allocation3 + $0x68] sm:$0xf]
    %v200 = vld [vmem:[#allocation3 + $0x6c] sm:$0xff]
    %v201 = vld [vmem:[#allocation3 + $0x74] sm:$0xf]
    %v202 = vld [vmem:[#allocation3 + $0x78] sm:$0xff]
    %v203 = vld [vmem:[#allocation3 + $0x80] sm:$0xf]
    %v204 = vld [vmem:[#allocation3 + $0x84] sm:$0xff]
    %v205 = vld [vmem:[#allocation3 + $0x8c] sm:$0xf]
    %v206 = vld [vmem:[#allocation3 + $0x90] sm:$0xff]
    %v207 = vld [vmem:[#allocation3 + $0x98] sm:$0xf]
    %v208 = vld [vmem:[#allocation3 + $0x9c] sm:$0xff]
    %v209 = vld [vmem:[#allocation3 + $0xa4] sm:$0xf]
    %v210 = vld [vmem:[#allocation3 + $0xa8] sm:$0xff]
    %v211 = vld [vmem:[#allocation3 + $0xb0] sm:$0xf]
    %v212 = vld [vmem:[#allocation3 + $0xb4] sm:$0xff]
    %v213 = vld [vmem:[#allocation3 + $0xbc] sm:$0xf]
    %v214 = vld [vmem:[#allocation3 + $0xc0] sm:$0xff]
    %v215 = vld [vmem:[#allocation3 + $0xc8] sm:$0xf]
    %v216 = vld [vmem:[#allocation3 + $0xcc] sm:$0xff]
    %v217 = vld [vmem:[#allocation3 + $0xd4] sm:$0xf]
    %v218 = vld [vmem:[#allocation3 + $0xd8] sm:$0xff]
    %v219 = vld [vmem:[#allocation3 + $0xe0] sm:$0xf]
    %v220 = vld [vmem:[#allocation3 + $0xe4] sm:$0xff]
    %v221 = vld [vmem:[#allocation3 + $0xec] sm:$0xf]
    %v222 = vld [vmem:[#allocation3 + $0xf0] sm:$0xff]
    %v223 = vld [vmem:[#allocation3 + $0xf8] sm:$0xf]
    %v224 = vld [vmem:[#allocation3 + $0xfc] sm:$0xff]
    %v225 = vld [vmem:[#allocation3 + $0x104] sm:$0xf]
    %v226 = vld [vmem:[#allocation3 + $0x108] sm:$0xff]
    %v227 = vld [vmem:[#allocation3 + $0x110] sm:$0xf]
    %v228 = vld [vmem:[#allocation3 + $0x114] sm:$0xff]
    %v229 = vld [vmem:[#allocation3 + $0x11c] sm:$0xf]
    %v230 = vld [vmem:[#allocation3 + $0x120] sm:$0xff]
    %v231 = vld [vmem:[#allocation3 + $0x128] sm:$0xf]
    %v232 = vld [vmem:[#allocation3 + $0x12c] sm:$0xff]
    %v233 = vld [vmem:[#allocation3 + $0x134] sm:$0xf]
    %v234 = vld [vmem:[#allocation3 + $0x138] sm:$0xff]
    %v235 = vld [vmem:[#allocation3 + $0x140] sm:$0xf]
    %v236 = vld [vmem:[#allocation3 + $0x144] sm:$0xff]
    %v237 = vld [vmem:[#allocation3 + $0x14c] sm:$0xf]
    %v238 = vld [vmem:[#allocation3 + $0x150] sm:$0xff]
    %v239 = vld [vmem:[#allocation3 + $0x158] sm:$0xf]
    %v240 = vld [vmem:[#allocation3 + $0x15c] sm:$0xff]
    %v241 = vld [vmem:[#allocation3 + $0x164] sm:$0xf]
    %v242 = vld [vmem:[#allocation3 + $0x168] sm:$0xff]
    %v243 = vld [vmem:[#allocation3 + $0x170] sm:$0xf]
    %v244 = vld [vmem:[#allocation3 + $0x174] sm:$0xff]
    %v245 = vld [vmem:[#allocation3 + $0x17c] sm:$0xf]
    %v246 = vld [vmem:[#allocation3 + $0x180] sm:$0xff]
    %v247 = vld [vmem:[#allocation3 + $0x188] sm:$0xf]
    %v248 = vld [vmem:[#allocation3 + $0x18c] sm:$0xff]
    %v249 = vld [vmem:[#allocation3 + $0x194] sm:$0xf]
    %v250 = vld [vmem:[#allocation3 + $0x198] sm:$0xff]
    %v251 = vld [vmem:[#allocation3 + $0x1a0] sm:$0xf]
    %v252 = vld [vmem:[#allocation3 + $0x1a4] sm:$0xff]
    %v253 = vld [vmem:[#allocation3 + $0x1ac] sm:$0xf]
    %v254 = vld [vmem:[#allocation3 + $0x1b0] sm:$0xff]
    %v255 = vld [vmem:[#allocation3 + $0x1b8] sm:$0xf]
    %v256 = vld [vmem:[#allocation3 + $0x1bc] sm:$0xff]
    %v257 = vld [vmem:[#allocation3 + $0x1c4] sm:$0xf]
    %v258 = vld [vmem:[#allocation3 + $0x1c8] sm:$0xff]
    %v259 = vld [vmem:[#allocation3 + $0x1d0] sm:$0xf]
    %v260 = vld [vmem:[#allocation3 + $0x1d4] sm:$0xff]
    %v261 = vld [vmem:[#allocation3 + $0x1dc] sm:$0xf]
    %v262 = vld [vmem:[#allocation3 + $0x1e0] sm:$0xff]
    %v263 = vld [vmem:[#allocation3 + $0x1e8] sm:$0xf]
    %v264 = vld [vmem:[#allocation3 + $0x1ec] sm:$0xff]
    %v265 = vld [vmem:[#allocation3 + $0x1f4] sm:$0xf]
    %v266 = vld [vmem:[#allocation3 + $0x1f8] sm:$0xff]
    %v267 = vld [vmem:[#allocation3 + $0x200] sm:$0xf]
    %v268 = vld [vmem:[#allocation3 + $0x204] sm:$0xff]
    %v269 = vld [vmem:[#allocation3 + $0x20c] sm:$0xf]
    %v270 = vld [vmem:[#allocation3 + $0x210] sm:$0xff]
    %v271 = vld [vmem:[#allocation3 + $0x218] sm:$0xf]
    %v272 = vld [vmem:[#allocation3 + $0x21c] sm:$0xff]
    %v273 = vld [vmem:[#allocation3 + $0x224] sm:$0xf]
    %v274 = vld [vmem:[#allocation3 + $0x228] sm:$0xff]
    %v275 = vld [vmem:[#allocation3 + $0x230] sm:$0xf]
    %v276 = vld [vmem:[#allocation3 + $0x234] sm:$0xff]
    %v277 = vld [vmem:[#allocation3 + $0x23c] sm:$0xf]
    %v278 = vld [vmem:[#allocation3 + $0x240] sm:$0xff]
    %v279 = vld [vmem:[#allocation3 + $0x248] sm:$0xf]
    %v280 = vld [vmem:[#allocation3 + $0x24c] sm:$0xff]
    %v281 = vld [vmem:[#allocation3 + $0x254] sm:$0xf]
    %v282 = vld [vmem:[#allocation3 + $0x258] sm:$0xff]
    %v283 = vld [vmem:[#allocation3 + $0x260] sm:$0xf]
    %v284 = vld [vmem:[#allocation3 + $0x264] sm:$0xff]
    %v285 = vld [vmem:[#allocation3 + $0x26c] sm:$0xf]
    %v286 = vld [vmem:[#allocation3 + $0x270] sm:$0xff]
    %v287 = vld [vmem:[#allocation3 + $0x278] sm:$0xf]
    %v288 = vld [vmem:[#allocation3 + $0x27c] sm:$0xff]
    %v289 = vld [vmem:[#allocation3 + $0x284] sm:$0xf]
    %v290 = vld [vmem:[#allocation3 + $0x288] sm:$0xff]
    %v291 = vld [vmem:[#allocation3 + $0x290] sm:$0xf]
    %v292 = vld [vmem:[#allocation3 + $0x294] sm:$0xff]
    %v293 = vld [vmem:[#allocation3 + $0x29c] sm:$0xf]
    %v294 = vld [vmem:[#allocation3 + $0x2a0] sm:$0xff]
    %v295 = vld [vmem:[#allocation3 + $0x2a8] sm:$0xf]
    %v296 = vld [vmem:[#allocation3 + $0x2ac] sm:$0xff]
    %v297 = vld [vmem:[#allocation3 + $0x2b4] sm:$0xf]
    %v298 = vld [vmem:[#allocation3 + $0x2b8] sm:$0xff]
    %v299 = vld [vmem:[#allocation3 + $0x2c0] sm:$0xf]
    %v300 = vld [vmem:[#allocation3 + $0x2c4] sm:$0xff]
    %v301 = vld [vmem:[#allocation3 + $0x2cc] sm:$0xf]
    %v302 = vld [vmem:[#allocation3 + $0x2d0] sm:$0xff]
    %v303 = vld [vmem:[#allocation3 + $0x2d8] sm:$0xf]
    %v304 = vld [vmem:[#allocation3 + $0x2dc] sm:$0xff]
    %v305 = vld [vmem:[#allocation3 + $0x2e4] sm:$0xf]
    %v306 = vld [vmem:[#allocation3 + $0x2e8] sm:$0xff]
    %v307 = vld [vmem:[#allocation3 + $0x2f0] sm:$0xf]
    %v308 = vld [vmem:[#allocation3 + $0x2f4] sm:$0xff]
    %v309 = vld [vmem:[#allocation3 + $0x2fc] sm:$0xf]
    %s310 = scalar_lea.vmem %s5, 1
    %v311 = vld [vmem:[%s310] ss:$4 sm:$0x7]
    %v313 = vlaneseq
    %v314 = vshrl.u32 %v313, 7
    %v315 = vsub.s32 0, %v314
    %v316 = vrot.slane %v311, %v315
    %v317 = vlaneseq
    %v318 = vshrl.u32 %v317, 7
    %v319 = vsub.s32 1, %v318
    %v320 = vrot.slane %v311, %v319
    %v321 = vlaneseq
    %v322 = vshrl.u32 %v321, 7
    %v323 = vsub.s32 2, %v322
    %v324 = vrot.slane %v311, %v323
    %v456 = vunpack.c.l.b16 %v182
    %v457 = vunpack.c.h.b16 %v182
    %v458 = vunpack.c.l.b16 %v183
    %v459 = vunpack.c.l.b16 %v184
    %v460 = vunpack.c.h.b16 %v184
    %v461 = vunpack.c.l.b16 %v185
    %v462 = vunpack.c.l.b16 %v186
    %v463 = vunpack.c.h.b16 %v186
    %v464 = vunpack.c.l.b16 %v187
    %v465 = vunpack.c.l.b16 %v188
    %v466 = vunpack.c.h.b16 %v188
    %v467 = vunpack.c.l.b16 %v189
    %v468 = vunpack.c.l.b16 %v190
    %v469 = vunpack.c.h.b16 %v190
    %v470 = vunpack.c.l.b16 %v191
    %v471 = vunpack.c.l.b16 %v192
    %v472 = vunpack.c.h.b16 %v192
    %v473 = vunpack.c.l.b16 %v193
    %v474 = vunpack.c.l.b16 %v194
    %v475 = vunpack.c.h.b16 %v194
    %v476 = vunpack.c.l.b16 %v195
    %v477 = vunpack.c.l.b16 %v196
    %v478 = vunpack.c.h.b16 %v196
    %v479 = vunpack.c.l.b16 %v197
    %v480 = vunpack.c.l.b16 %v198
    %v481 = vunpack.c.h.b16 %v198
    %v482 = vunpack.c.l.b16 %v199
    %v483 = vunpack.c.l.b16 %v200
    %v484 = vunpack.c.h.b16 %v200
    %v485 = vunpack.c.l.b16 %v201
    %v486 = vunpack.c.l.b16 %v202
    %v487 = vunpack.c.h.b16 %v202
    %v488 = vunpack.c.l.b16 %v203
    %v489 = vunpack.c.l.b16 %v204
    %v490 = vunpack.c.h.b16 %v204
    %v491 = vunpack.c.l.b16 %v205
    %v492 = vunpack.c.l.b16 %v206
    %v493 = vunpack.c.h.b16 %v206
    %v494 = vunpack.c.l.b16 %v207
    %v495 = vunpack.c.l.b16 %v208
    %v496 = vunpack.c.h.b16 %v208
    %v497 = vunpack.c.l.b16 %v209
    %v498 = vunpack.c.l.b16 %v210
    %v499 = vunpack.c.h.b16 %v210
    %v500 = vunpack.c.l.b16 %v211
    %v501 = vunpack.c.l.b16 %v212
    %v502 = vunpack.c.h.b16 %v212
    %v503 = vunpack.c.l.b16 %v213
    %v504 = vunpack.c.l.b16 %v214
    %v505 = vunpack.c.h.b16 %v214
    %v506 = vunpack.c.l.b16 %v215
    %v507 = vunpack.c.l.b16 %v216
    %v508 = vunpack.c.h.b16 %v216
    %v509 = vunpack.c.l.b16 %v217
    %v510 = vunpack.c.l.b16 %v218
    %v511 = vunpack.c.h.b16 %v218
    %v512 = vunpack.c.l.b16 %v219
    %v513 = vunpack.c.l.b16 %v220
    %v514 = vunpack.c.h.b16 %v220
    %v515 = vunpack.c.l.b16 %v221
    %v516 = vunpack.c.l.b16 %v222
    %v517 = vunpack.c.h.b16 %v222
    %v518 = vunpack.c.l.b16 %v223
    %v519 = vunpack.c.l.b16 %v224
    %v520 = vunpack.c.h.b16 %v224
    %v521 = vunpack.c.l.b16 %v225
    %v522 = vunpack.c.l.b16 %v226
    %v523 = vunpack.c.h.b16 %v226
    %v524 = vunpack.c.l.b16 %v227
    %v525 = vunpack.c.l.b16 %v228
    %v526 = vunpack.c.h.b16 %v228
    %v527 = vunpack.c.l.b16 %v229
    %v528 = vunpack.c.l.b16 %v230
    %v529 = vunpack.c.h.b16 %v230
    %v530 = vunpack.c.l.b16 %v231
    %v531 = vunpack.c.l.b16 %v232
    %v532 = vunpack.c.h.b16 %v232
    %v533 = vunpack.c.l.b16 %v233
    %v534 = vunpack.c.l.b16 %v234
    %v535 = vunpack.c.h.b16 %v234
    %v536 = vunpack.c.l.b16 %v235
    %v537 = vunpack.c.l.b16 %v236
    %v538 = vunpack.c.h.b16 %v236
    %v539 = vunpack.c.l.b16 %v237
    %v540 = vunpack.c.l.b16 %v238
    %v541 = vunpack.c.h.b16 %v238
    %v542 = vunpack.c.l.b16 %v239
    %v543 = vunpack.c.l.b16 %v240
    %v544 = vunpack.c.h.b16 %v240
    %v545 = vunpack.c.l.b16 %v241
    %v546 = vunpack.c.l.b16 %v242
    %v547 = vunpack.c.h.b16 %v242
    %v548 = vunpack.c.l.b16 %v243
    %v549 = vunpack.c.l.b16 %v244
    %v550 = vunpack.c.h.b16 %v244
    %v551 = vunpack.c.l.b16 %v245
    %v552 = vunpack.c.l.b16 %v246
    %v553 = vunpack.c.h.b16 %v246
    %v554 = vunpack.c.l.b16 %v247
    %v555 = vunpack.c.l.b16 %v248
    %v556 = vunpack.c.h.b16 %v248
    %v557 = vunpack.c.l.b16 %v249
    %v558 = vunpack.c.l.b16 %v250
    %v559 = vunpack.c.h.b16 %v250
    %v560 = vunpack.c.l.b16 %v251
    %v561 = vunpack.c.l.b16 %v252
    %v562 = vunpack.c.h.b16 %v252
    %v563 = vunpack.c.l.b16 %v253
    %v564 = vunpack.c.l.b16 %v254
    %v565 = vunpack.c.h.b16 %v254
    %v566 = vunpack.c.l.b16 %v255
    %v567 = vunpack.c.l.b16 %v256
    %v568 = vunpack.c.h.b16 %v256
    %v569 = vunpack.c.l.b16 %v257
    %v570 = vunpack.c.l.b16 %v258
    %v571 = vunpack.c.h.b16 %v258
    %v572 = vunpack.c.l.b16 %v259
    %v573 = vunpack.c.l.b16 %v260
    %v574 = vunpack.c.h.b16 %v260
    %v575 = vunpack.c.l.b16 %v261
    %v576 = vunpack.c.l.b16 %v262
    %v577 = vunpack.c.h.b16 %v262
    %v578 = vunpack.c.l.b16 %v263
    %v579 = vunpack.c.l.b16 %v264
    %v580 = vunpack.c.h.b16 %v264
    %v581 = vunpack.c.l.b16 %v265
    %v582 = vunpack.c.l.b16 %v266
    %v583 = vunpack.c.h.b16 %v266
    %v584 = vunpack.c.l.b16 %v267
    %v585 = vunpack.c.l.b16 %v268
    %v586 = vunpack.c.h.b16 %v268
    %v587 = vunpack.c.l.b16 %v269
    %v588 = vunpack.c.l.b16 %v270
    %v589 = vunpack.c.h.b16 %v270
    %v590 = vunpack.c.l.b16 %v271
    %v591 = vunpack.c.l.b16 %v272
    %v592 = vunpack.c.h.b16 %v272
    %v593 = vunpack.c.l.b16 %v273
    %v594 = vunpack.c.l.b16 %v274
    %v595 = vunpack.c.h.b16 %v274
    %v596 = vunpack.c.l.b16 %v275
    %v597 = vunpack.c.l.b16 %v276
    %v598 = vunpack.c.h.b16 %v276
    %v599 = vunpack.c.l.b16 %v277
    %v600 = vunpack.c.l.b16 %v278
    %v601 = vunpack.c.h.b16 %v278
    %v602 = vunpack.c.l.b16 %v279
    %v603 = vunpack.c.l.b16 %v280
    %v604 = vunpack.c.h.b16 %v280
    %v605 = vunpack.c.l.b16 %v281
    %v606 = vunpack.c.l.b16 %v282
    %v607 = vunpack.c.h.b16 %v282
    %v608 = vunpack.c.l.b16 %v283
    %v609 = vunpack.c.l.b16 %v284
    %v610 = vunpack.c.h.b16 %v284
    %v611 = vunpack.c.l.b16 %v285
    %v612 = vunpack.c.l.b16 %v286
    %v613 = vunpack.c.h.b16 %v286
    %v614 = vunpack.c.l.b16 %v287
    %v615 = vunpack.c.l.b16 %v288
    %v616 = vunpack.c.h.b16 %v288
    %v617 = vunpack.c.l.b16 %v289
    %v618 = vunpack.c.l.b16 %v290
    %v619 = vunpack.c.h.b16 %v290
    %v620 = vunpack.c.l.b16 %v291
    %v621 = vunpack.c.l.b16 %v292
    %v622 = vunpack.c.h.b16 %v292
    %v623 = vunpack.c.l.b16 %v293
    %v624 = vunpack.c.l.b16 %v294
    %v625 = vunpack.c.h.b16 %v294
    %v626 = vunpack.c.l.b16 %v295
    %v627 = vunpack.c.l.b16 %v296
    %v628 = vunpack.c.h.b16 %v296
    %v629 = vunpack.c.l.b16 %v297
    %v630 = vunpack.c.l.b16 %v298
    %v631 = vunpack.c.h.b16 %v298
    %v632 = vunpack.c.l.b16 %v299
    %v633 = vunpack.c.l.b16 %v300
    %v634 = vunpack.c.h.b16 %v300
    %v635 = vunpack.c.l.b16 %v301
    %v636 = vunpack.c.l.b16 %v302
    %v637 = vunpack.c.h.b16 %v302
    %v638 = vunpack.c.l.b16 %v303
    %v639 = vunpack.c.l.b16 %v304
    %v640 = vunpack.c.h.b16 %v304
    %v641 = vunpack.c.l.b16 %v305
    %v642 = vunpack.c.l.b16 %v306
    %v643 = vunpack.c.h.b16 %v306
    %v644 = vunpack.c.l.b16 %v307
    %v645 = vunpack.c.l.b16 %v308
    %v646 = vunpack.c.h.b16 %v308
    %v647 = vunpack.c.l.b16 %v309
    %v648 = vpack.c.b16 %v459, %v456
    %v649 = vpack.c.b16 %v460, %v457
    %v650 = vpack.c.b16 %v461, %v458
    %v651 = vpack.c.b16 %v465, %v462
    %v652 = vpack.c.b16 %v466, %v463
    %v653 = vpack.c.b16 %v467, %v464
    %v654 = vpack.c.b16 %v471, %v468
    %v655 = vpack.c.b16 %v472, %v469
    %v656 = vpack.c.b16 %v473, %v470
    %v657 = vpack.c.b16 %v477, %v474
    %v658 = vpack.c.b16 %v478, %v475
    %v659 = vpack.c.b16 %v479, %v476
    %v660 = vpack.c.b16 %v483, %v480
    %v661 = vpack.c.b16 %v484, %v481
    %v662 = vpack.c.b16 %v485, %v482
    %v663 = vpack.c.b16 %v489, %v486
    %v664 = vpack.c.b16 %v490, %v487
    %v665 = vpack.c.b16 %v491, %v488
    %v666 = vpack.c.b16 %v495, %v492
    %v667 = vpack.c.b16 %v496, %v493
    %v668 = vpack.c.b16 %v497, %v494
    %v669 = vpack.c.b16 %v501, %v498
    %v670 = vpack.c.b16 %v502, %v499
    %v671 = vpack.c.b16 %v503, %v500
    %v672 = vpack.c.b16 %v507, %v504
    %v673 = vpack.c.b16 %v508, %v505
    %v674 = vpack.c.b16 %v509, %v506
    %v675 = vpack.c.b16 %v513, %v510
    %v676 = vpack.c.b16 %v514, %v511
    %v677 = vpack.c.b16 %v515, %v512
    %v678 = vpack.c.b16 %v519, %v516
    %v679 = vpack.c.b16 %v520, %v517
    %v680 = vpack.c.b16 %v521, %v518
    %v681 = vpack.c.b16 %v525, %v522
    %v682 = vpack.c.b16 %v526, %v523
    %v683 = vpack.c.b16 %v527, %v524
    %v684 = vpack.c.b16 %v531, %v528
    %v685 = vpack.c.b16 %v532, %v529
    %v686 = vpack.c.b16 %v533, %v530
    %v687 = vpack.c.b16 %v537, %v534
    %v688 = vpack.c.b16 %v538, %v535
    %v689 = vpack.c.b16 %v539, %v536
    %v690 = vpack.c.b16 %v543, %v540
    %v691 = vpack.c.b16 %v544, %v541
    %v692 = vpack.c.b16 %v545, %v542
    %v693 = vpack.c.b16 %v549, %v546
    %v694 = vpack.c.b16 %v550, %v547
    %v695 = vpack.c.b16 %v551, %v548
    %v696 = vpack.c.b16 %v555, %v552
    %v697 = vpack.c.b16 %v556, %v553
    %v698 = vpack.c.b16 %v557, %v554
    %v699 = vpack.c.b16 %v561, %v558
    %v700 = vpack.c.b16 %v562, %v559
    %v701 = vpack.c.b16 %v563, %v560
    %v702 = vpack.c.b16 %v567, %v564
    %v703 = vpack.c.b16 %v568, %v565
    %v704 = vpack.c.b16 %v569, %v566
    %v705 = vpack.c.b16 %v573, %v570
    %v706 = vpack.c.b16 %v574, %v571
    %v707 = vpack.c.b16 %v575, %v572
    %v708 = vpack.c.b16 %v579, %v576
    %v709 = vpack.c.b16 %v580, %v577
    %v710 = vpack.c.b16 %v581, %v578
    %v711 = vpack.c.b16 %v585, %v582
    %v712 = vpack.c.b16 %v586, %v583
    %v713 = vpack.c.b16 %v587, %v584
    %v714 = vpack.c.b16 %v591, %v588
    %v715 = vpack.c.b16 %v592, %v589
    %v716 = vpack.c.b16 %v593, %v590
    %v717 = vpack.c.b16 %v597, %v594
    %v718 = vpack.c.b16 %v598, %v595
    %v719 = vpack.c.b16 %v599, %v596
    %v720 = vpack.c.b16 %v603, %v600
    %v721 = vpack.c.b16 %v604, %v601
    %v722 = vpack.c.b16 %v605, %v602
    %v723 = vpack.c.b16 %v609, %v606
    %v724 = vpack.c.b16 %v610, %v607
    %v725 = vpack.c.b16 %v611, %v608
    %v726 = vpack.c.b16 %v615, %v612
    %v727 = vpack.c.b16 %v616, %v613
    %v728 = vpack.c.b16 %v617, %v614
    %v729 = vpack.c.b16 %v621, %v618
    %v730 = vpack.c.b16 %v622, %v619
    %v731 = vpack.c.b16 %v623, %v620
    %v732 = vpack.c.b16 %v627, %v624
    %v733 = vpack.c.b16 %v628, %v625
    %v734 = vpack.c.b16 %v629, %v626
    %v735 = vpack.c.b16 %v633, %v630
    %v736 = vpack.c.b16 %v634, %v631
    %v737 = vpack.c.b16 %v635, %v632
    %v738 = vpack.c.b16 %v639, %v636
    %v739 = vpack.c.b16 %v640, %v637
    %v740 = vpack.c.b16 %v641, %v638
    %v741 = vpack.c.b16 %v645, %v642
    %v742 = vpack.c.b16 %v646, %v643
    %v743 = vpack.c.b16 %v647, %v644
    %840 = vmatprep.subr.bf16.mxu0 %v649
    %841 = vmatpush1.bf16.msra.mxu0 %v648
    %842 = vmatprep.subr.bf16.mxu0 %v652
    %843 = vmatpush1.bf16.msra.mxu0 %v651
    %844 = vmatprep.subr.bf16.mxu0 %v655
    %845 = vmatpush1.bf16.msra.mxu0 %v654
    %846 = vmatprep.subr.bf16.mxu0 %v658
    %847 = vmatpush1.bf16.msra.mxu0 %v657
    %848 = vmatprep.subr.bf16.mxu0 %v661
    %849 = vmatpush1.bf16.msra.mxu0 %v660
    %850 = vmatprep.subr.bf16.mxu0 %v664
    %851 = vmatpush1.bf16.msra.mxu0 %v663
    %852 = vmatprep.subr.bf16.mxu0 %v667
    %853 = vmatpush1.bf16.msra.mxu0 %v666
    %854 = vmatprep.subr.bf16.mxu0 %v670
    %855 = vmatpush1.bf16.msra.mxu0 %v669
    %856 = vmatprep.subr.bf16.mxu0 %v673
    %857 = vmatpush1.bf16.msra.mxu0 %v672
    %858 = vmatprep.subr.bf16.mxu0 %v676
    %859 = vmatpush1.bf16.msra.mxu0 %v675
    %860 = vmatprep.subr.bf16.mxu0 %v679
    %861 = vmatpush1.bf16.msra.mxu0 %v678
    %862 = vmatprep.subr.bf16.mxu0 %v682
    %863 = vmatpush1.bf16.msra.mxu0 %v681
    %864 = vmatprep.subr.bf16.mxu0 %v685
    %865 = vmatpush1.bf16.msra.mxu0 %v684
    %866 = vmatprep.subr.bf16.mxu0 %v688
    %867 = vmatpush1.bf16.msra.mxu0 %v687
    %868 = vmatprep.subr.bf16.mxu0 %v691
    %869 = vmatpush1.bf16.msra.mxu0 %v690
    %870 = vmatprep.subr.bf16.mxu0 %v694
    %871 = vmatpush1.bf16.msra.mxu0 %v693
    %872 = vmatprep.mubr.bf16.mxu0 %v179
    %873 = vmatmul.mubr.bf16.gmra.mrb[0].mxu0 %v178
    %v874 = vpop.f32.mrb[0].mxu0
    %v875 = vadd.f32 %v316, %v874
    %v876 = vpop.f32.mrb[0].mxu0
    %v877 = vadd.f32 %v320, %v876
    %v878 = vpop.f32.mrb[0].mxu0
    %v879 = vpop.f32.mrb[0].mxu0
    %880 = vdwg.mxu0
    %881 = vmatprep.subr.bf16.mxu0 %v697
    %882 = vmatpush1.bf16.msra.mxu0 %v696
    %883 = vmatprep.subr.bf16.mxu0 %v700
    %884 = vmatpush1.bf16.msra.mxu0 %v699
    %885 = vmatprep.subr.bf16.mxu0 %v703
    %886 = vmatpush1.bf16.msra.mxu0 %v702
    %887 = vmatprep.subr.bf16.mxu0 %v706
    %888 = vmatpush1.bf16.msra.mxu0 %v705
    %889 = vmatprep.subr.bf16.mxu0 %v709
    %890 = vmatpush1.bf16.msra.mxu0 %v708
    %891 = vmatprep.subr.bf16.mxu0 %v712
    %892 = vmatpush1.bf16.msra.mxu0 %v711
    %893 = vmatprep.subr.bf16.mxu0 %v715
    %894 = vmatpush1.bf16.msra.mxu0 %v714
    %895 = vmatprep.subr.bf16.mxu0 %v718
    %896 = vmatpush1.bf16.msra.mxu0 %v717
    %897 = vmatprep.subr.bf16.mxu0 %v721
    %898 = vmatpush1.bf16.msra.mxu0 %v720
    %899 = vmatprep.subr.bf16.mxu0 %v724
    %900 = vmatpush1.bf16.msra.mxu0 %v723
    %901 = vmatprep.subr.bf16.mxu0 %v727
    %902 = vmatpush1.bf16.msra.mxu0 %v726
    %903 = vmatprep.subr.bf16.mxu0 %v730
    %904 = vmatpush1.bf16.msra.mxu0 %v729
    %905 = vmatprep.subr.bf16.mxu0 %v733
    %906 = vmatpush1.bf16.msra.mxu0 %v732
    %907 = vmatprep.subr.bf16.mxu0 %v736
    %908 = vmatpush1.bf16.msra.mxu0 %v735
    %909 = vmatprep.subr.bf16.mxu0 %v739
    %910 = vmatpush1.bf16.msra.mxu0 %v738
    %911 = vmatprep.subr.bf16.mxu0 %v742
    %912 = vmatpush1.bf16.msra.mxu0 %v741
    %913 = vmatprep.mubr.bf16.mxu0 %v181
    %914 = vmatmul.mubr.bf16.gmra.mrb[0].mxu0 %v180
    %v915 = vpop.f32.mrb[0].mxu0
    %v916 = vadd.f32 %v875, %v915
    %v917 = vpop.f32.mrb[0].mxu0
    %v918 = vadd.f32 %v877, %v917
    %v919 = vpop.f32.mrb[0].mxu0
    %v920 = vpop.f32.mrb[0].mxu0
    %921 = vdwg.mxu0
    %922 = vmatprep.subr.bf16.mxu0 0
    %923 = vmatpush1.bf16.msra.mxu0 %v650
    %924 = vmatprep.subr.bf16.mxu0 0
    %925 = vmatpush1.bf16.msra.mxu0 %v653
    %926 = vmatprep.subr.bf16.mxu0 0
    %927 = vmatpush1.bf16.msra.mxu0 %v656
    %928 = vmatprep.subr.bf16.mxu0 0
    %929 = vmatpush1.bf16.msra.mxu0 %v659
    %930 = vmatprep.subr.bf16.mxu0 0
    %931 = vmatpush1.bf16.msra.mxu0 %v662
    %932 = vmatprep.subr.bf16.mxu0 0
    %933 = vmatpush1.bf16.msra.mxu0 %v665
    %934 = vmatprep.subr.bf16.mxu0 0
    %935 = vmatpush1.bf16.msra.mxu0 %v668
    %936 = vmatprep.subr.bf16.mxu0 0
    %937 = vmatpush1.bf16.msra.mxu0 %v671
    %938 = vmatprep.subr.bf16.mxu0 0
    %939 = vmatpush1.bf16.msra.mxu0 %v674
    %940 = vmatprep.subr.bf16.mxu0 0
    %941 = vmatpush1.bf16.msra.mxu0 %v677
    %942 = vmatprep.subr.bf16.mxu0 0
    %943 = vmatpush1.bf16.msra.mxu0 %v680
    %944 = vmatprep.subr.bf16.mxu0 0
    %945 = vmatpush1.bf16.msra.mxu0 %v683
    %946 = vmatprep.subr.bf16.mxu0 0
    %947 = vmatpush1.bf16.msra.mxu0 %v686
    %948 = vmatprep.subr.bf16.mxu0 0
    %949 = vmatpush1.bf16.msra.mxu0 %v689
    %950 = vmatprep.subr.bf16.mxu0 0
    %951 = vmatpush1.bf16.msra.mxu0 %v692
    %952 = vmatprep.subr.bf16.mxu0 0
    %953 = vmatpush1.bf16.msra.mxu0 %v695
    %954 = vmatprep.mubr.bf16.mxu0 %v179
    %955 = vmatmul.mubr.bf16.gmra.mrb[0].mxu0 %v178
    %v956 = vpop.f32.mrb[0].mxu0
    %v957 = vadd.f32 %v324, %v956
    %v958 = vpop.f32.mrb[0].mxu0
    %v959 = vpop.f32.mrb[0].mxu0
    %v960 = vpop.f32.mrb[0].mxu0
    %961 = vdwg.mxu0
    %962 = vmatprep.subr.bf16.mxu0 0
    %963 = vmatpush1.bf16.msra.mxu0 %v698
    %964 = vmatprep.subr.bf16.mxu0 0
    %965 = vmatpush1.bf16.msra.mxu0 %v701
    %966 = vmatprep.subr.bf16.mxu0 0
    %967 = vmatpush1.bf16.msra.mxu0 %v704
    %968 = vmatprep.subr.bf16.mxu0 0
    %969 = vmatpush1.bf16.msra.mxu0 %v707
    %970 = vmatprep.subr.bf16.mxu0 0
    %971 = vmatpush1.bf16.msra.mxu0 %v710
    %972 = vmatprep.subr.bf16.mxu0 0
    %973 = vmatpush1.bf16.msra.mxu0 %v713
    %974 = vmatprep.subr.bf16.mxu0 0
    %975 = vmatpush1.bf16.msra.mxu0 %v716
    %976 = vmatprep.subr.bf16.mxu0 0
    %977 = vmatpush1.bf16.msra.mxu0 %v719
    %978 = vmatprep.subr.bf16.mxu0 0
    %979 = vmatpush1.bf16.msra.mxu0 %v722
    %980 = vmatprep.subr.bf16.mxu0 0
    %981 = vmatpush1.bf16.msra.mxu0 %v725
    %982 = vmatprep.subr.bf16.mxu0 0
    %983 = vmatpush1.bf16.msra.mxu0 %v728
    %984 = vmatprep.subr.bf16.mxu0 0
    %985 = vmatpush1.bf16.msra.mxu0 %v731
    %986 = vmatprep.subr.bf16.mxu0 0
    %987 = vmatpush1.bf16.msra.mxu0 %v734
    %988 = vmatprep.subr.bf16.mxu0 0
    %989 = vmatpush1.bf16.msra.mxu0 %v737
    %990 = vmatprep.subr.bf16.mxu0 0
    %991 = vmatpush1.bf16.msra.mxu0 %v740
    %992 = vmatprep.subr.bf16.mxu0 0
    %993 = vmatpush1.bf16.msra.mxu0 %v743
    %994 = vmatprep.mubr.bf16.mxu0 %v181
    %995 = vmatmul.mubr.bf16.gmra.mrb[0].mxu0 %v180
    %v996 = vpop.f32.mrb[0].mxu0
    %v997 = vadd.f32 %v957, %v996
    %v998 = vpop.f32.mrb[0].mxu0
    %v999 = vpop.f32.mrb[0].mxu0
    %v1000 = vpop.f32.mrb[0].mxu0
    %1001 = vdwg.mxu0
    %v1002 = vmax.f32 %v916, 0.0
    %v1003 = vmax.f32 %v918, 0.0
    %v1004 = vmax.f32 %v997, 0.0
    %v1005 = vpack.c.bf16 %v1002, %v1002
    %v1006 = vpack.c.bf16 %v1003, %v1003
    %v1007 = vpack.c.bf16 %v1004, %v1004
    %v1008 = vld [vmem:[%s4] sm:$0xf]
    %v1009 = vld [vmem:[%s4 + $0x4] sm:$0xf]
    %v1010 = vld [vmem:[%s4 + $0x8] sm:$0xf]
    %v1011 = vld [vmem:[%s4 + $0xc] sm:$0xf]
    %v1012 = vld [vmem:[%s4 + $0x10] sm:$0xf]
    %v1013 = vld [vmem:[%s4 + $0x14] sm:$0xf]
    %v1014 = vld [vmem:[%s4 + $0x18] sm:$0xf]
    %v1015 = vld [vmem:[%s4 + $0x1c] sm:$0xf]
    %v1016 = vld [vmem:[%s4 + $0x20] sm:$0xf]
    %v1017 = vld [vmem:[%s4 + $0x24] sm:$0xf]
    %v1018 = vld [vmem:[%s4 + $0x28] sm:$0xf]
    %v1019 = vld [vmem:[%s4 + $0x2c] sm:$0xf]
    %v1020 = vld [vmem:[%s4 + $0x30] sm:$0xf]
    %v1021 = vld [vmem:[%s4 + $0x34] sm:$0xf]
    %v1022 = vld [vmem:[%s4 + $0x38] sm:$0xf]
    %v1023 = vld [vmem:[%s4 + $0x3c] sm:$0xf]
    %v1024 = vld [vmem:[%s4 + $0x40] sm:$0xf]
    %v1025 = vld [vmem:[%s4 + $0x44] sm:$0xf]
    %v1026 = vld [vmem:[%s4 + $0x48] sm:$0xf]
    %v1027 = vld [vmem:[%s4 + $0x4c] sm:$0xf]
    %v1028 = vld [vmem:[%s4 + $0x50] sm:$0xf]
    %v1029 = vld [vmem:[%s4 + $0x54] sm:$0xf]
    %v1030 = vld [vmem:[%s4 + $0x58] sm:$0xf]
    %v1031 = vld [vmem:[%s4 + $0x5c] sm:$0xf]
    %v1032 = vld [vmem:[%s4 + $0x60] sm:$0xf]
    %v1033 = vld [vmem:[%s4 + $0x64] sm:$0xf]
    %v1034 = vld [vmem:[%s4 + $0x68] sm:$0xf]
    %v1035 = vld [vmem:[%s4 + $0x6c] sm:$0xf]
    %v1036 = vld [vmem:[%s4 + $0x70] sm:$0xf]
    %v1037 = vld [vmem:[%s4 + $0x74] sm:$0xf]
    %v1038 = vld [vmem:[%s4 + $0x78] sm:$0xf]
    %v1039 = vld [vmem:[%s4 + $0x7c] sm:$0xf]
    %v1040 = vld [vmem:[%s4 + $0x80] sm:$0xf]
    %v1041 = vld [vmem:[%s4 + $0x84] sm:$0xf]
    %v1042 = vld [vmem:[%s4 + $0x88] sm:$0xf]
    %v1043 = vld [vmem:[%s4 + $0x8c] sm:$0xf]
    %v1044 = vld [vmem:[%s4 + $0x90] sm:$0xf]
    %v1045 = vld [vmem:[%s4 + $0x94] sm:$0xf]
    %v1046 = vld [vmem:[%s4 + $0x98] sm:$0xf]
    %v1047 = vld [vmem:[%s4 + $0x9c] sm:$0xf]
    %v1048 = vld [vmem:[%s4 + $0xa0] sm:$0xf]
    %v1049 = vld [vmem:[%s4 + $0xa4] sm:$0xf]
    %v1050 = vld [vmem:[%s4 + $0xa8] sm:$0xf]
    %v1051 = vld [vmem:[%s4 + $0xac] sm:$0xf]
    %v1052 = vld [vmem:[%s4 + $0xb0] sm:$0xf]
    %v1053 = vld [vmem:[%s4 + $0xb4] sm:$0xf]
    %v1054 = vld [vmem:[%s4 + $0xb8] sm:$0xf]
    %v1055 = vld [vmem:[%s4 + $0xbc] sm:$0xf]
    %v1056 = vld [vmem:[%s5 + $0x2] sm:$0x1]
    %v1057 = vlaneseq
    %v1058 = vshrl.u32 %v1057, 7
    %v1059 = vsub.s32 0, %v1058
    %v1060 = vrot.slane %v1056, %v1059
    %v1109 = vunpack.c.l.b16 %v1008
    %v1110 = vunpack.c.l.b16 %v1009
    %v1111 = vunpack.c.l.b16 %v1010
    %v1112 = vunpack.c.l.b16 %v1011
    %v1113 = vunpack.c.l.b16 %v1012
    %v1114 = vunpack.c.l.b16 %v1013
    %v1115 = vunpack.c.l.b16 %v1014
    %v1116 = vunpack.c.l.b16 %v1015
    %v1117 = vunpack.c.l.b16 %v1016
    %v1118 = vunpack.c.l.b16 %v1017
    %v1119 = vunpack.c.l.b16 %v1018
    %v1120 = vunpack.c.l.b16 %v1019
    %v1121 = vunpack.c.l.b16 %v1020
    %v1122 = vunpack.c.l.b16 %v1021
    %v1123 = vunpack.c.l.b16 %v1022
    %v1124 = vunpack.c.l.b16 %v1023
    %v1125 = vunpack.c.l.b16 %v1024
    %v1126 = vunpack.c.l.b16 %v1025
    %v1127 = vunpack.c.l.b16 %v1026
    %v1128 = vunpack.c.l.b16 %v1027
    %v1129 = vunpack.c.l.b16 %v1028
    %v1130 = vunpack.c.l.b16 %v1029
    %v1131 = vunpack.c.l.b16 %v1030
    %v1132 = vunpack.c.l.b16 %v1031
    %v1133 = vunpack.c.l.b16 %v1032
    %v1134 = vunpack.c.l.b16 %v1033
    %v1135 = vunpack.c.l.b16 %v1034
    %v1136 = vunpack.c.l.b16 %v1035
    %v1137 = vunpack.c.l.b16 %v1036
    %v1138 = vunpack.c.l.b16 %v1037
    %v1139 = vunpack.c.l.b16 %v1038
    %v1140 = vunpack.c.l.b16 %v1039
    %v1141 = vunpack.c.l.b16 %v1040
    %v1142 = vunpack.c.l.b16 %v1041
    %v1143 = vunpack.c.l.b16 %v1042
    %v1144 = vunpack.c.l.b16 %v1043
    %v1145 = vunpack.c.l.b16 %v1044
    %v1146 = vunpack.c.l.b16 %v1045
    %v1147 = vunpack.c.l.b16 %v1046
    %v1148 = vunpack.c.l.b16 %v1047
    %v1149 = vunpack.c.l.b16 %v1048
    %v1150 = vunpack.c.l.b16 %v1049
    %v1151 = vunpack.c.l.b16 %v1050
    %v1152 = vunpack.c.l.b16 %v1051
    %v1153 = vunpack.c.l.b16 %v1052
    %v1154 = vunpack.c.l.b16 %v1053
    %v1155 = vunpack.c.l.b16 %v1054
    %v1156 = vunpack.c.l.b16 %v1055
    %v1157 = vpack.c.b16 %v1110, %v1109
    %v1158 = vpack.c.b16 %v1112, %v1111
    %v1159 = vpack.c.b16 %v1114, %v1113
    %v1160 = vpack.c.b16 %v1116, %v1115
    %v1161 = vpack.c.b16 %v1118, %v1117
    %v1162 = vpack.c.b16 %v1120, %v1119
    %v1163 = vpack.c.b16 %v1122, %v1121
    %v1164 = vpack.c.b16 %v1124, %v1123
    %v1165 = vpack.c.b16 %v1126, %v1125
    %v1166 = vpack.c.b16 %v1128, %v1127
    %v1167 = vpack.c.b16 %v1130, %v1129
    %v1168 = vpack.c.b16 %v1132, %v1131
    %v1169 = vpack.c.b16 %v1134, %v1133
    %v1170 = vpack.c.b16 %v1136, %v1135
    %v1171 = vpack.c.b16 %v1138, %v1137
    %v1172 = vpack.c.b16 %v1140, %v1139
    %v1173 = vpack.c.b16 %v1142, %v1141
    %v1174 = vpack.c.b16 %v1144, %v1143
    %v1175 = vpack.c.b16 %v1146, %v1145
    %v1176 = vpack.c.b16 %v1148, %v1147
    %v1177 = vpack.c.b16 %v1150, %v1149
    %v1178 = vpack.c.b16 %v1152, %v1151
    %v1179 = vpack.c.b16 %v1154, %v1153
    %v1180 = vpack.c.b16 %v1156, %v1155
    %1205 = vmatprep.subr.bf16.mxu0 0
    %1206 = vmatpush1.bf16.msra.mxu0 %v1157
    %1207 = vmatprep.subr.bf16.mxu0 0
    %1208 = vmatpush1.bf16.msra.mxu0 %v1158
    %1209 = vmatprep.subr.bf16.mxu0 0
    %1210 = vmatpush1.bf16.msra.mxu0 %v1159
    %1211 = vmatprep.subr.bf16.mxu0 0
    %1212 = vmatpush1.bf16.msra.mxu0 %v1160
    %1213 = vmatprep.subr.bf16.mxu0 0
    %1214 = vmatpush1.bf16.msra.mxu0 %v1161
    %1215 = vmatprep.subr.bf16.mxu0 0
    %1216 = vmatpush1.bf16.msra.mxu0 %v1162
    %1217 = vmatprep.subr.bf16.mxu0 0
    %1218 = vmatpush1.bf16.msra.mxu0 %v1163
    %1219 = vmatprep.subr.bf16.mxu0 0
    %1220 = vmatpush1.bf16.msra.mxu0 %v1164
    %1221 = vmatprep.subr.bf16.mxu0 0
    %1222 = vmatpush1.bf16.msra.mxu0 %v1165
    %1223 = vmatprep.subr.bf16.mxu0 0
    %1224 = vmatpush1.bf16.msra.mxu0 %v1166
    %1225 = vmatprep.subr.bf16.mxu0 0
    %1226 = vmatpush1.bf16.msra.mxu0 %v1167
    %1227 = vmatprep.subr.bf16.mxu0 0
    %1228 = vmatpush1.bf16.msra.mxu0 %v1168
    %1229 = vmatprep.subr.bf16.mxu0 0
    %1230 = vmatpush1.bf16.msra.mxu0 %v1169
    %1231 = vmatprep.subr.bf16.mxu0 0
    %1232 = vmatpush1.bf16.msra.mxu0 %v1170
    %1233 = vmatprep.subr.bf16.mxu0 0
    %1234 = vmatpush1.bf16.msra.mxu0 %v1171
    %1235 = vmatprep.subr.bf16.mxu0 0
    %1236 = vmatpush1.bf16.msra.mxu0 %v1172
    %1237 = vmatprep.mubr.bf16.mxu0 %v1006
    %1238 = vmatmul.mubr.bf16.gmra.mrb[0].mxu0 %v1005
    %v1239 = vpop.f32.mrb[0].mxu0
    %v1240 = vadd.f32 %v1060, %v1239
    %v1241 = vpop.f32.mrb[0].mxu0
    %v1242 = vpop.f32.mrb[0].mxu0
    %v1243 = vpop.f32.mrb[0].mxu0
    %1244 = vdwg.mxu0
    %1245 = vmatprep.subr.bf16.mxu0 0
    %1246 = vmatpush1.bf16.msra.mxu0 %v1173
    %1247 = vmatprep.subr.bf16.mxu0 0
    %1248 = vmatpush1.bf16.msra.mxu0 %v1174
    %1249 = vmatprep.subr.bf16.mxu0 0
    %1250 = vmatpush1.bf16.msra.mxu0 %v1175
    %1251 = vmatprep.subr.bf16.mxu0 0
    %1252 = vmatpush1.bf16.msra.mxu0 %v1176
    %1253 = vmatprep.subr.bf16.mxu0 0
    %1254 = vmatpush1.bf16.msra.mxu0 %v1177
    %1255 = vmatprep.subr.bf16.mxu0 0
    %1256 = vmatpush1.bf16.msra.mxu0 %v1178
    %1257 = vmatprep.subr.bf16.mxu0 0
    %1258 = vmatpush1.bf16.msra.mxu0 %v1179
    %1259 = vmatprep.subr.bf16.mxu0 0
    %1260 = vmatpush1.bf16.msra.mxu0 %v1180
    %1261 = vmatprep.subr.bf16.mxu0 0
    %1262 = vmatpush1.bf16.msra.mxu0 0
    %1263 = vmatprep.subr.bf16.mxu0 0
    %1264 = vmatpush1.bf16.msra.mxu0 0
    %1265 = vmatprep.subr.bf16.mxu0 0
    %1266 = vmatpush1.bf16.msra.mxu0 0
    %1267 = vmatprep.subr.bf16.mxu0 0
    %1268 = vmatpush1.bf16.msra.mxu0 0
    %1269 = vmatprep.subr.bf16.mxu0 0
    %1270 = vmatpush1.bf16.msra.mxu0 0
    %1271 = vmatprep.subr.bf16.mxu0 0
    %1272 = vmatpush1.bf16.msra.mxu0 0
    %1273 = vmatprep.subr.bf16.mxu0 0
    %1274 = vmatpush1.bf16.msra.mxu0 0
    %1275 = vmatprep.subr.bf16.mxu0 0
    %1276 = vmatpush1.bf16.msra.mxu0 0
    %1277 = vmatprep.mubr.bf16.mxu0 0
    %1278 = vmatmul.mubr.bf16.gmra.mrb[0].mxu0 %v1007
    %v1279 = vpop.f32.mrb[0].mxu0
    %v1280 = vadd.f32 %v1240, %v1279
    %v1281 = vpop.f32.mrb[0].mxu0
    %v1282 = vpop.f32.mrb[0].mxu0
    %v1283 = vpop.f32.mrb[0].mxu0
    %1284 = vdwg.mxu0
    %v1285 = vtanh.pop %v1280
    %s1286 = sld [smem:[#allocation2]]
    %v1287 = vstv %s1286
    %v1288 = vmul.f32 %v1287, %v1285
    %vm1289 = vcmask 64512
    %1290 = vst.msk [vmem:[#allocation6] sm:$0xff] %vm1289, %v1288
    // Predicated region
    $region30: #{tpu_custom_call.1} parent=1 // pred_check
      _
    $region31: #{tpu_custom_call.1} parent=1 // pred_check_branch
      %1292 = sbr.rel (0) target = $region33
    $region32: #{tpu_custom_call.1} parent=1 // pred_region
      %s1294 = ssub.s32 128, 128
      %1295 = vsyncadd [#allocation5], %s1294
      %s1297 = sshll.u32 [#allocation6], 4
      %s1298 = int_to_ptr.vmem [resolvable:$true] %s1297
      %1300 = dma.vmem_to_hbm [thread:$0]  %s1298, 128, %s6, [#allocation5]
    $region33: #{tpu_custom_call.1} parent=1 // pred_fallthru
      _
    // Predicated region
    $region34: #{tpu_custom_call.1} parent=1 // pred_check
      _
    $region35: #{tpu_custom_call.1} parent=1 // pred_check_branch
      %1302 = sbr.rel (0) target = $region37
    $region36: #{tpu_custom_call.1} parent=1 // pred_region
      %1303 = dma.done [#allocation5], 128
    $region37: #{tpu_custom_call.1} parent=1 // pred_fallthru
      _
    %1304 = vsyncpa [#allocation4], 1
    %1305 = vsyncpa [#allocation5], 1

</llo_original>
